<compile_context>
chip_gen: v7x
topology: tpu7x:2x2x1
jax: 0.10.0
libtpu: 0.0.40
codegen_flags: <defaults>
</compile_context>

<pallas_src>
import functools

import jax
import jax.numpy as jnp
from jax.experimental import pallas as pl
from jax.experimental.pallas import tpu as pltpu


def make_combined_loss_kernel(collapse_epsilon, total_b, block_b, tiles_per_core, ragged):
    eps = float(collapse_epsilon)

    def kernel(outputs_ref, features_ref, means_ref, means_sq_ref, labels_ref,
               out_ref, ce_acc, col_acc):
        t = pl.program_id(1)

        @pl.when(t == 0)
        def _init():
            ce_acc[...] = jnp.zeros_like(ce_acc)
            col_acc[...] = jnp.zeros_like(col_acc)

        logits = outputs_ref[...].astype(jnp.float32)      # [bb, C]
        feats = features_ref[...]                          # [bb, D] native dtype
        means = means_ref[...]                             # [C, D]  native dtype (resident)
        means_sq = means_sq_ref[...]                       # [1, C]  f32 (resident)
        labels = labels_ref[...]                           # [bb, 1] i32

        bb, C = logits.shape

        if ragged:
            p = pl.program_id(0)
            tile = p * tiles_per_core + t
            rows = tile * block_b + jax.lax.broadcasted_iota(jnp.int32, (bb, 1), 0)
            valid = rows < total_b                                         # [bb, 1] bool
            valid_f = valid.astype(jnp.float32)
            # Zero padded rows *before* any transcendental so garbage can't poison the sums.
            logits = jnp.where(valid, logits, 0.0)
            feats = jnp.where(valid, feats, jnp.zeros_like(feats))
        else:
            valid_f = None

        one_hot = (jax.lax.broadcasted_iota(jnp.int32, (bb, C), 1) == labels)
        one_hot = one_hot.astype(jnp.float32)                              # [bb, C]

        # --- cross entropy (stable logsumexp) ---
        m = jnp.max(logits, axis=-1, keepdims=True)                        # [bb, 1]
        lse = m + jnp.log(jnp.sum(jnp.exp(logits - m), axis=-1, keepdims=True))
        logit_y = jnp.sum(one_hot * logits, axis=-1, keepdims=True)        # [bb, 1]
        ce = lse - logit_y                                                 # [bb, 1]

        # --- neural collapse hinge, D-contraction form (MXU runs dense over D) ---
        feats_f32 = feats.astype(jnp.float32)
        f_sq = jnp.sum(feats_f32 * feats_f32, axis=-1, keepdims=True)      # [bb, 1]
        s = jax.lax.dot_general(feats, means, (((1,), (1,)), ((), ())),
                                preferred_element_type=jnp.float32)        # [bb, C]
        cross = jnp.sum(one_hot * s, axis=-1, keepdims=True)               # f . m_y
        msq_y = jnp.sum(one_hot * means_sq, axis=-1, keepdims=True)        # ||m_y||^2
        dist = jnp.sqrt(jnp.maximum(f_sq - 2.0 * cross + msq_y, 0.0))      # [bb, 1]
        col = jnp.maximum(eps - dist, 0.0)                                 # [bb, 1]

        if ragged:
            ce = ce * valid_f
            col = col * valid_f

        ce_acc[...] += jnp.sum(ce, axis=0, keepdims=True)
        col_acc[...] += jnp.sum(col, axis=0, keepdims=True)

        @pl.when(t == pl.num_programs(1) - 1)
        def _finalize():
            lane = jax.lax.broadcasted_iota(jnp.int32, (8, 128), 1)
            ce_b = jnp.broadcast_to(ce_acc[...], (8, 128))
            col_b = jnp.broadcast_to(col_acc[...], (8, 128))
            # lane 0 = sum(ce) for this core's batch slice, lane 1 = sum(collapse hinge)
            out_ref[...] = jnp.where(lane == 0, ce_b, jnp.where(lane == 1, col_b, 0.0))

    return kernel


def combined_loss(outputs, features, target_means, target_labels,
                  cls_weight=1.0, collapse_weight=0.1, collapse_epsilon=5.0,
                  block_b=512):
    """outputs [B,C], features [B,D], target_means [C,D], target_labels [B] int.
    Returns a scalar f32 loss. Inputs keep their native dtype on the wire."""
    B, C = outputs.shape
    Bf, D = features.shape
    assert B == Bf and target_means.shape == (C, D)

    labels2d = target_labels.astype(jnp.int32).reshape(B, 1)
    # Precompute ||mean_c||^2 once (O(C*D) glue) so the kernel never transposes / tiny-matmuls.
    means_sq = jnp.sum(target_means.astype(jnp.float32) ** 2, axis=-1)[None, :]  # [1, C] f32

    # --- batch-tile selection: biggest tile that fits a conservative scoped-VMEM budget ---
    bb = B if B <= block_b else max(8, (block_b // 8) * 8)

    def vmem_estimate(bb_):
        per_step = (bb_ * C * outputs.dtype.itemsize            # logits block
                    + bb_ * D * features.dtype.itemsize         # features block
                    + bb_ * 128 * 4)                            # labels block (lane-padded i32)
        resident = (C * D * target_means.dtype.itemsize         # class means
                    + 128 * 4 + 8 * 128 * 4)                    # ||mean||^2 + output block
        return 2 * per_step + 2 * resident + (1 << 20)          # double-buffered + slack

    while bb > 8 and vmem_estimate(bb) > (24 << 20):            # fits v5e/v6e/v7x scoped budgets
        bb = max(8, ((bb // 2) // 8) * 8)

    num_tiles = (B + bb - 1) // bb
    num_parallel = 2 if (num_tiles >= 2 and num_tiles % 2 == 0) else 1   # dual-TC split (v7x)
    tiles_per_core = num_tiles // num_parallel
    ragged = (num_tiles * bb != B)

    kernel = make_combined_loss_kernel(collapse_epsilon, B, bb, tiles_per_core, ragged)

    def batch_map(p, t):
        return (p * tiles_per_core + t, 0)

    grid_spec = pltpu.PrefetchScalarGridSpec(
        num_scalar_prefetch=0,
        grid=(num_parallel, tiles_per_core),
        in_specs=[
            pl.BlockSpec((bb, C), batch_map),               # logits      (pipelined)
            pl.BlockSpec((bb, D), batch_map),               # features    (pipelined)
            pl.BlockSpec((C, D), lambda p, t: (0, 0)),      # class means (resident)
            pl.BlockSpec((1, C), lambda p, t: (0, 0)),      # ||mean||^2  (resident)
            pl.BlockSpec((bb, 1), batch_map),               # labels      (pipelined)
        ],
        out_specs=pl.BlockSpec((8, 128), lambda p, t: (p, 0)),   # per-core partial sums
        scratch_shapes=[pltpu.VMEM((1, 1), jnp.float32),         # ce accumulator
                        pltpu.VMEM((1, 1), jnp.float32)],        # collapse accumulator
    )

    bytes_in = (B * C * outputs.dtype.itemsize + B * D * features.dtype.itemsize
                + C * D * target_means.dtype.itemsize + B * 4 + C * 4)
    cost = pl.CostEstimate(
        flops=2 * B * C * D + 10 * B * (C + D),
        transcendentals=B * (C + 2),
        bytes_accessed=bytes_in + num_parallel * 8 * 128 * 4,
    )
    vmem_limit = int(max(16 << 20, min(int(1.25 * vmem_estimate(bb)), 96 << 20)))

    out = pl.pallas_call(
        kernel,
        out_shape=jax.ShapeDtypeStruct((num_parallel * 8, 128), jnp.float32),
        grid_spec=grid_spec,
        compiler_params=pltpu.CompilerParams(
            dimension_semantics=("parallel", "arbitrary"),
            vmem_limit_bytes=vmem_limit),
        cost_estimate=cost,
    )(outputs, features, target_means, means_sq, labels2d)

    # Final scalar combine in the wrapper: sum per-core partials, divide by the true B, weight.
    partials = out.reshape(num_parallel, 8, 128)[:, 0, :2]      # [P, (ce_sum, col_sum)]
    ce_mean = jnp.sum(partials[:, 0]) / float(B)
    col_mean = jnp.sum(partials[:, 1]) / float(B)
    return cls_weight * ce_mean + collapse_weight * col_mean


def combined_loss_ref(outputs, features, target_means, target_labels,
                      cls_weight=1.0, collapse_weight=0.1, collapse_epsilon=5.0):
    """Pure-JAX reference mirroring the PyTorch module."""
    logits = outputs.astype(jnp.float32)
    lse = jax.scipy.special.logsumexp(logits, axis=-1)
    logit_y = jnp.take_along_axis(logits, target_labels[:, None], axis=-1)[:, 0]
    ce = jnp.mean(lse - logit_y)

    means_g = target_means.astype(jnp.float32)[target_labels]               # [B, D]
    dist = jnp.linalg.norm(features.astype(jnp.float32) - means_g, axis=-1)
    col = jnp.mean(jnp.maximum(collapse_epsilon - dist, 0.0))
    return cls_weight * ce + collapse_weight * col


if __name__ == "__main__":
    key = jax.random.PRNGKey(0)

    def make_inputs(key, B, C, D):
        k1, k2, k3, k4 = jax.random.split(key, 4)
        outputs = jax.random.normal(k1, (B, C), dtype=jnp.float32)
        features = 2.0 * jax.random.normal(k2, (B, D), dtype=jnp.float32)
        target_means = jax.random.normal(k3, (C, D), dtype=jnp.float32)     # densified dict
        target_labels = jax.random.randint(k4, (B,), 0, C, dtype=jnp.int32)
        return outputs, features, target_means, target_labels

    cases = [
        # (B, C, D, collapse_epsilon, block_b)
        (8, 8, 32, 5.0, 512),    # single tile, default epsilon (collapse term mostly clamped)
        (8, 8, 32, 13.0, 512),   # single tile, epsilon that exercises the hinge
        (64, 8, 32, 13.0, 16),   # 4 tiles -> dual "parallel" partials, even split
        (40, 8, 32, 13.0, 16),   # 3 tiles -> ragged last tile masked
    ]

    kall = jax.random.split(key, len(cases))
    for kc, (B, C, D, eps, blk) in zip(kall, cases):
        outs, feats, means, labels = make_inputs(kc, B, C, D)
        loss = combined_loss(outs, feats, means, labels,
                             collapse_epsilon=eps, block_b=blk)
        loss = jax.block_until_ready(loss)
        ref = combined_loss_ref(outs, feats, means, labels, collapse_epsilon=eps)
        assert jnp.allclose(loss, ref, rtol=1e-4, atol=1e-4), (B, eps, loss, ref)

    print("KERNEL_OK")
</pallas_src>

<mosaic_0001>
module attributes {stable_mosaic.version = 11 : i64} {
  func.func @kernel(%arg0: i32, %arg1: i32, %arg2: memref<8x8xf32, #tpu.memory_space<vmem>>, %arg3: memref<8x32xf32, #tpu.memory_space<vmem>>, %arg4: memref<8x32xf32, #tpu.memory_space<vmem>>, %arg5: memref<1x8xf32, #tpu.memory_space<vmem>>, %arg6: memref<8x1xi32, #tpu.memory_space<vmem>>, %arg7: memref<8x128xf32, #tpu.memory_space<vmem>>, %arg8: memref<1x1xf32, #tpu.memory_space<vmem>>, %arg9: memref<1x1xf32, #tpu.memory_space<vmem>>) attributes {dimension_semantics = [#tpu.dimension_semantics<parallel>, #tpu.dimension_semantics<arbitrary>], iteration_bounds = array<i64: 1, 1>, scalar_prefetch = 0 : i64, scratch_operands = 2 : i64, tpu.core_type = #tpu.core_type<tc>, window_params = [{transform_indices = @transform_0, window_bounds = array<i64: 8, 8>}, {transform_indices = @transform_1, window_bounds = array<i64: 8, 32>}, {pipeline_mode = #tpu.pipeline_mode<synchronous>, transform_indices = @transform_2, window_bounds = array<i64: 8, 32>}, {pipeline_mode = #tpu.pipeline_mode<synchronous>, transform_indices = @transform_3, window_bounds = array<i64: 1, 8>}, {transform_indices = @transform_4, window_bounds = array<i64: 8, 1>}, {transform_indices = @transform_5, window_bounds = array<i64: 8, 128>}]} {
    %c0_i32 = arith.constant 0 : i32
    %0 = arith.cmpi eq, %arg1, %c0_i32 : i32
    %1 = arith.extui %0 : i1 to i32
    %c0_i32_0 = arith.constant 0 : i32
    %2 = arith.cmpi ne, %1, %c0_i32_0 : i32
    scf.if %2 {
      %cst_32 = arith.constant 0.000000e+00 : f32
      %61 = vector.broadcast %cst_32 : f32 to vector<1x1xf32>
      %c0_33 = arith.constant 0 : index
      %c0_34 = arith.constant 0 : index
      %62 = vector.load %arg8[%c0_33, %c0_34] : memref<1x1xf32, #tpu.memory_space<vmem>>, vector<1x1xf32>
      tpu.vector_store %arg8[%c0_33, %c0_34], %61 {strides = array<i32>} : memref<1x1xf32, #tpu.memory_space<vmem>>, vector<1x1xf32>,
      %cst_35 = arith.constant 0.000000e+00 : f32
      %63 = vector.broadcast %cst_35 : f32 to vector<1x1xf32>
      %c0_36 = arith.constant 0 : index
      %c0_37 = arith.constant 0 : index
      %64 = vector.load %arg9[%c0_36, %c0_37] : memref<1x1xf32, #tpu.memory_space<vmem>>, vector<1x1xf32>
      tpu.vector_store %arg9[%c0_36, %c0_37], %63 {strides = array<i32>} : memref<1x1xf32, #tpu.memory_space<vmem>>, vector<1x1xf32>,
    } else {
    }
    %c0 = arith.constant 0 : index
    %c0_1 = arith.constant 0 : index
    %3 = vector.load %arg2[%c0, %c0_1] : memref<8x8xf32, #tpu.memory_space<vmem>>, vector<8x8xf32>
    %c0_2 = arith.constant 0 : index
    %c0_3 = arith.constant 0 : index
    %4 = vector.load %arg3[%c0_2, %c0_3] : memref<8x32xf32, #tpu.memory_space<vmem>>, vector<8x32xf32>
    %c0_4 = arith.constant 0 : index
    %c0_5 = arith.constant 0 : index
    %5 = vector.load %arg4[%c0_4, %c0_5] : memref<8x32xf32, #tpu.memory_space<vmem>>, vector<8x32xf32>
    %c0_6 = arith.constant 0 : index
    %c0_7 = arith.constant 0 : index
    %6 = vector.load %arg5[%c0_6, %c0_7] : memref<1x8xf32, #tpu.memory_space<vmem>>, vector<1x8xf32>
    %c0_8 = arith.constant 0 : index
    %c0_9 = arith.constant 0 : index
    %7 = vector.load %arg6[%c0_8, %c0_9] : memref<8x1xi32, #tpu.memory_space<vmem>>, vector<8x1xi32>
    %8 = tpu.iota {dimensions = array<i32: 1>} : vector<8x8xi32>
    %9 = vector.broadcast %7 : vector<8x1xi32> to vector<8x8xi32>
    %10 = arith.cmpi eq, %8, %9 : vector<8x8xi32>
    %11 = arith.extui %10 : vector<8x8xi1> to vector<8x8xi32>
    %12 = arith.sitofp %11 : vector<8x8xi32> to vector<8x8xf32>
    %cst = arith.constant dense<0xFF800000> : vector<8xf32>
    %13 = vector.multi_reduction <maximumf>, %3, %cst [1] : vector<8x8xf32> to vector<8xf32>
    %14 = vector.shape_cast %13 : vector<8xf32> to vector<8x1xf32>
    %15 = vector.broadcast %14 : vector<8x1xf32> to vector<8x8xf32>
    %16 = arith.subf %3, %15 : vector<8x8xf32>
    %17 = math.exp %16 : vector<8x8xf32>
    %cst_10 = arith.constant dense<0.000000e+00> : vector<8xf32>
    %18 = vector.multi_reduction <add>, %17, %cst_10 [1] : vector<8x8xf32> to vector<8xf32>
    %19 = vector.shape_cast %18 : vector<8xf32> to vector<8x1xf32>
    %20 = math.log %19 : vector<8x1xf32>
    %21 = arith.addf %14, %20 : vector<8x1xf32>
    %22 = arith.mulf %12, %3 : vector<8x8xf32>
    %cst_11 = arith.constant dense<0.000000e+00> : vector<8xf32>
    %23 = vector.multi_reduction <add>, %22, %cst_11 [1] : vector<8x8xf32> to vector<8xf32>
    %24 = vector.shape_cast %23 : vector<8xf32> to vector<8x1xf32>
    %25 = arith.subf %21, %24 : vector<8x1xf32>
    %26 = arith.mulf %4, %4 : vector<8x32xf32>
    %cst_12 = arith.constant dense<0.000000e+00> : vector<8xf32>
    %27 = vector.multi_reduction <add>, %26, %cst_12 [1] : vector<8x32xf32> to vector<8xf32>
    %28 = vector.shape_cast %27 : vector<8xf32> to vector<8x1xf32>
    %cst_13 = arith.constant dense<0.000000e+00> : vector<8x8xf32>
    %29 = tpu.matmul %4, %5, %cst_13 {dimension_numbers = #tpu.dot_dimension_numbers<[1], [1], [0], [0], [0, 0, 1, 0], [], []>} : vector<8x32xf32>, vector<8x32xf32>, vector<8x8xf32> -> vector<8x8xf32>
    %30 = arith.mulf %12, %29 : vector<8x8xf32>
    %cst_14 = arith.constant dense<0.000000e+00> : vector<8xf32>
    %31 = vector.multi_reduction <add>, %30, %cst_14 [1] : vector<8x8xf32> to vector<8xf32>
    %32 = vector.shape_cast %31 : vector<8xf32> to vector<8x1xf32>
    %33 = vector.broadcast %6 : vector<1x8xf32> to vector<8x8xf32>
    %34 = arith.mulf %12, %33 : vector<8x8xf32>
    %cst_15 = arith.constant dense<0.000000e+00> : vector<8xf32>
    %35 = vector.multi_reduction <add>, %34, %cst_15 [1] : vector<8x8xf32> to vector<8xf32>
    %36 = vector.shape_cast %35 : vector<8xf32> to vector<8x1xf32>
    %cst_16 = arith.constant 2.000000e+00 : f32
    %37 = vector.broadcast %cst_16 : f32 to vector<8x1xf32>
    %38 = arith.mulf %37, %32 : vector<8x1xf32>
    %39 = arith.subf %28, %38 : vector<8x1xf32>
    %40 = arith.addf %39, %36 : vector<8x1xf32>
    %cst_17 = arith.constant 0.000000e+00 : f32
    %41 = vector.broadcast %cst_17 : f32 to vector<8x1xf32>
    %42 = arith.maximumf %40, %41 : vector<8x1xf32>
    %43 = math.sqrt %42 : vector<8x1xf32>
    %cst_18 = arith.constant 5.000000e+00 : f32
    %44 = vector.broadcast %cst_18 : f32 to vector<8x1xf32>
    %45 = arith.subf %44, %43 : vector<8x1xf32>
    %cst_19 = arith.constant 0.000000e+00 : f32
    %46 = vector.broadcast %cst_19 : f32 to vector<8x1xf32>
    %47 = arith.maximumf %45, %46 : vector<8x1xf32>
    %c0_20 = arith.constant 0 : index
    %c0_21 = arith.constant 0 : index
    %48 = vector.load %arg8[%c0_20, %c0_21] : memref<1x1xf32, #tpu.memory_space<vmem>>, vector<1x1xf32>
    %cst_22 = arith.constant dense<0.000000e+00> : vector<1xf32>
    %49 = vector.multi_reduction <add>, %25, %cst_22 [0] : vector<8x1xf32> to vector<1xf32>
    %50 = vector.shape_cast %49 : vector<1xf32> to vector<1x1xf32>
    %51 = arith.addf %48, %50 : vector<1x1xf32>
    %c0_23 = arith.constant 0 : index
    %c0_24 = arith.constant 0 : index
    %52 = vector.load %arg8[%c0_23, %c0_24] : memref<1x1xf32, #tpu.memory_space<vmem>>, vector<1x1xf32>
    tpu.vector_store %arg8[%c0_23, %c0_24], %51 {strides = array<i32>} : memref<1x1xf32, #tpu.memory_space<vmem>>, vector<1x1xf32>,
    %c0_25 = arith.constant 0 : index
    %c0_26 = arith.constant 0 : index
    %53 = vector.load %arg9[%c0_25, %c0_26] : memref<1x1xf32, #tpu.memory_space<vmem>>, vector<1x1xf32>
    %cst_27 = arith.constant dense<0.000000e+00> : vector<1xf32>
    %54 = vector.multi_reduction <add>, %47, %cst_27 [0] : vector<8x1xf32> to vector<1xf32>
    %55 = vector.shape_cast %54 : vector<1xf32> to vector<1x1xf32>
    %56 = arith.addf %53, %55 : vector<1x1xf32>
    %c0_28 = arith.constant 0 : index
    %c0_29 = arith.constant 0 : index
    %57 = vector.load %arg9[%c0_28, %c0_29] : memref<1x1xf32, #tpu.memory_space<vmem>>, vector<1x1xf32>
    tpu.vector_store %arg9[%c0_28, %c0_29], %56 {strides = array<i32>} : memref<1x1xf32, #tpu.memory_space<vmem>>, vector<1x1xf32>,
    %c0_i32_30 = arith.constant 0 : i32
    %58 = arith.cmpi eq, %arg1, %c0_i32_30 : i32
    %59 = arith.extui %58 : i1 to i32
    %c0_i32_31 = arith.constant 0 : i32
    %60 = arith.cmpi ne, %59, %c0_i32_31 : i32
    scf.if %60 {
      %61 = tpu.iota {dimensions = array<i32: 1>} : vector<8x128xi32>
      %c0_32 = arith.constant 0 : index
      %c0_33 = arith.constant 0 : index
      %62 = vector.load %arg8[%c0_32, %c0_33] : memref<1x1xf32, #tpu.memory_space<vmem>>, vector<1x1xf32>
      %63 = vector.shape_cast %62 : vector<1x1xf32> to vector<1x1xf32>
      %64 = vector.broadcast %63 : vector<1x1xf32> to vector<8x128xf32>
      %c0_34 = arith.constant 0 : index
      %c0_35 = arith.constant 0 : index
      %65 = vector.load %arg9[%c0_34, %c0_35] : memref<1x1xf32, #tpu.memory_space<vmem>>, vector<1x1xf32>
      %66 = vector.shape_cast %65 : vector<1x1xf32> to vector<1x1xf32>
      %67 = vector.broadcast %66 : vector<1x1xf32> to vector<8x128xf32>
      %c0_i32_36 = arith.constant 0 : i32
      %68 = vector.broadcast %c0_i32_36 : i32 to vector<8x128xi32>
      %69 = arith.cmpi eq, %61, %68 : vector<8x128xi32>
      %c1_i32 = arith.constant 1 : i32
      %70 = vector.broadcast %c1_i32 : i32 to vector<8x128xi32>
      %71 = arith.cmpi eq, %61, %70 : vector<8x128xi32>
      %cst_37 = arith.constant 0.000000e+00 : f32
      %72 = vector.broadcast %cst_37 : f32 to vector<8x128xf32>
      %73 = arith.select %71, %67, %72 : vector<8x128xi1>, vector<8x128xf32>
      %74 = arith.select %69, %64, %73 : vector<8x128xi1>, vector<8x128xf32>
      %c0_38 = arith.constant 0 : index
      %c0_39 = arith.constant 0 : index
      %75 = vector.load %arg7[%c0_38, %c0_39] : memref<8x128xf32, #tpu.memory_space<vmem>>, vector<8x128xf32>
      tpu.vector_store %arg7[%c0_38, %c0_39], %74 {strides = array<i32>} : memref<8x128xf32, #tpu.memory_space<vmem>>, vector<8x128xf32>,
    } else {
    }
    return
  }
  func.func @transform_0(%arg0: i32, %arg1: i32) -> (i32, i32) {
    %c1_i32 = arith.constant 1 : i32
    %0 = arith.muli %arg0, %c1_i32 : i32
    %1 = arith.addi %0, %arg1 : i32
    %c0_i32 = arith.constant 0 : i32
    %c0_i32_0 = arith.constant 0 : i32
    return %1, %c0_i32 : i32, i32
  }
  func.func @transform_1(%arg0: i32, %arg1: i32) -> (i32, i32) {
    %c1_i32 = arith.constant 1 : i32
    %0 = arith.muli %arg0, %c1_i32 : i32
    %1 = arith.addi %0, %arg1 : i32
    %c0_i32 = arith.constant 0 : i32
    %c0_i32_0 = arith.constant 0 : i32
    return %1, %c0_i32 : i32, i32
  }
  func.func @transform_2(%arg0: i32, %arg1: i32) -> (i32, i32) {
    %c0_i32 = arith.constant 0 : i32
    %c0_i32_0 = arith.constant 0 : i32
    %c0_i32_1 = arith.constant 0 : i32
    return %c0_i32, %c0_i32_0 : i32, i32
  }
  func.func @transform_3(%arg0: i32, %arg1: i32) -> (i32, i32) {
    %c0_i32 = arith.constant 0 : i32
    %c0_i32_0 = arith.constant 0 : i32
    %c0_i32_1 = arith.constant 0 : i32
    return %c0_i32, %c0_i32_0 : i32, i32
  }
  func.func @transform_4(%arg0: i32, %arg1: i32) -> (i32, i32) {
    %c1_i32 = arith.constant 1 : i32
    %0 = arith.muli %arg0, %c1_i32 : i32
    %1 = arith.addi %0, %arg1 : i32
    %c0_i32 = arith.constant 0 : i32
    %c0_i32_0 = arith.constant 0 : i32
    return %1, %c0_i32 : i32, i32
  }
  func.func @transform_5(%arg0: i32, %arg1: i32) -> (i32, i32) {
    %c0_i32 = arith.constant 0 : i32
    %c0_i32_0 = arith.constant 0 : i32
    return %arg0, %c0_i32 : i32, i32
  }
}

</mosaic_0001>

<llo_original>
// kernel: tpu_custom_call.1
$region0: #{tpu_custom_call.1}
  #allocation0 [shape = 'u32[]', space=smem, size = 0x4, offset = 0x4, fixed_abs, tag = 'smem constant byte address 0x4 - core index']
  #allocation1 [shape = 'u32[144,128]{1,0:T(1,128)}', space=vmem, size = 0x12000, scoped, tag = 'internal scratch']
  #allocation2 [shape = 'f32[1,1]{1,0:T(1,128)}', space=vmem, size = 0x200, scoped, tag = 'scratch operand']
  #allocation3 [shape = 'f32[1,1]{1,0:T(1,128)}', space=vmem, size = 0x200, scoped, tag = 'scratch operand']
  %s0 = inlined_call_operand.vmem [shape: f32[8,8], index: 0, kind: input, shape index: {}]
  %s1 = inlined_call_operand.hbm [shape: f32[8,32], index: 1, kind: input, shape index: {}]
  %s2 = inlined_call_operand.vmem [shape: f32[8,32], index: 2, kind: input, shape index: {}]
  %s3 = inlined_call_operand.vmem [shape: f32[1,8], index: 3, kind: input, shape index: {}]
  %s4 = inlined_call_operand.vmem [shape: s32[8,1], index: 4, kind: input, shape index: {}]
  %s5 = inlined_call_operand.hbm [shape: f32[8,128], index: 5, kind: output, shape index: {}]
  %s6 = sld [smem:[#allocation0]]
  $region42: #{tpu_custom_call.1} parent=0
    _
  %s8 = ssub.s32 1, %s6
  %s9 = scalar_select 0, %s8, %s6
  $region1: #{tpu_custom_call.1} parent=0
    #allocation4 [shape = 'u8[4096]{0}', space=vmem, size = 0x1000, scoped, tag = 'input window, operand 1, single buffered']
    #allocation5 [shape = 's32[1]{0}', space=sflag, size = 0x4, scoped, tag = 'scoped memory for tpu_custom_call.1']
    #allocation6 [shape = 's32[1]{0}', space=sflag, size = 0x4, scoped, tag = 'scoped memory for tpu_custom_call.1']
    #allocation7 [shape = 'u8[4096]{0}', space=vmem, size = 0x1000, scoped, tag = 'output window, operand 0, single buffered']
    %10 = vsyncpa [#allocation5], 0
    %11 = vsyncpa [#allocation6], 0
    // Predicated region
    $region2: #{tpu_custom_call.1} parent=1 // pred_check
      _
    $region3: #{tpu_custom_call.1} parent=1 // pred_check_branch
      %13 = sbr.rel (0) target = $region5
    $region4: #{tpu_custom_call.1} parent=1 // pred_region
      %s14 = sadd.s32 0, 0
      %p15 = scmp.lt.s32.totalorder %s14, 0
      %s16 = scalar_select %p15, %s14, 0
      %s17 = smul.addr %s16, 8
      %s18 = scalar_lea.vmem %s0, %s17
      %s19 = sadd.s32 0, 0
    $region5: #{tpu_custom_call.1} parent=1 // pred_fallthru
      _
    // Predicated region
    $region6: #{tpu_custom_call.1} parent=1 // pred_check
      _
    $region7: #{tpu_custom_call.1} parent=1 // pred_check_branch
      %21 = sbr.rel (0) target = $region9
    $region8: #{tpu_custom_call.1} parent=1 // pred_region
      %s22 = sadd.s32 0, 0
      %s24 = ssub.s32 128, 128
      %25 = vsyncadd [#allocation5], %s24
      %s26 = smul.addr %s22, 128
      %s27 = scalar_lea.hbm %s1, %s26
      %s29 = sshll.u32 [#allocation4], 4
      %s30 = int_to_ptr.vmem [resolvable:$true] %s29
      %32 = dma.hbm_to_vmem [thread:$0]  %s27, 128, %s30, [#allocation5]
    $region9: #{tpu_custom_call.1} parent=1 // pred_fallthru
      _
    // Predicated region
    $region10: #{tpu_custom_call.1} parent=1 // pred_check
      _
    $region11: #{tpu_custom_call.1} parent=1 // pred_check_branch
      %34 = sbr.rel (0) target = $region13
    $region12: #{tpu_custom_call.1} parent=1 // pred_region
      _
    $region13: #{tpu_custom_call.1} parent=1 // pred_fallthru
      _
    // Predicated region
    $region14: #{tpu_custom_call.1} parent=1 // pred_check
      _
    $region15: #{tpu_custom_call.1} parent=1 // pred_check_branch
      %36 = sbr.rel (0) target = $region17
    $region16: #{tpu_custom_call.1} parent=1 // pred_region
      _
    $region17: #{tpu_custom_call.1} parent=1 // pred_fallthru
      _
    // Predicated region
    $region18: #{tpu_custom_call.1} parent=1 // pred_check
      _
    $region19: #{tpu_custom_call.1} parent=1 // pred_check_branch
      %38 = sbr.rel (0) target = $region21
    $region20: #{tpu_custom_call.1} parent=1 // pred_region
      %s39 = sadd.s32 0, 0
      %p40 = scmp.lt.s32.totalorder %s39, 0
      %s41 = scalar_select %p40, %s39, 0
      %s42 = smul.addr %s41, 8
      %s43 = scalar_lea.vmem %s4, %s42
      %s44 = sadd.s32 0, 0
    $region21: #{tpu_custom_call.1} parent=1 // pred_fallthru
      _
    // Predicated region
    $region22: #{tpu_custom_call.1} parent=1 // pred_check
      _
    $region23: #{tpu_custom_call.1} parent=1 // pred_check_branch
      %46 = sbr.rel (0) target = $region25
    $region24: #{tpu_custom_call.1} parent=1 // pred_region
      %47 = dma.done [#allocation5], 128
    $region25: #{tpu_custom_call.1} parent=1 // pred_fallthru
      _
    %s48 = sadd.s32 0, 0
    %p49 = scmp.lt.s32.totalorder %s48, 0
    %s50 = scalar_select %p49, %s48, 0
    %s51 = smul.addr %s50, 8
    %s52 = scalar_lea.vmem %s0, %s51
    %s53 = sadd.s32 0, 0
    %p54 = scmp.lt.s32.totalorder %s53, 0
    %s55 = scalar_select %p54, %s53, 0
    %s56 = smul.addr %s55, 8
    %s57 = scalar_lea.vmem %s4, %s56
    %s58 = sadd.s32 0, 0
    %p59 = scmp.lt.s32.totalorder %s58, 0
    %s60 = scalar_select %p59, %s58, 0
    %s61 = smul.addr %s60, 8
    %s62 = scalar_lea.vmem %s0, %s61
    %s63 = sadd.s32 0, 0
    %s64 = sadd.s32 0, 0
    %s65 = sadd.s32 0, 0
    %p66 = scmp.lt.s32.totalorder %s65, 0
    %s67 = scalar_select %p66, %s65, 0
    %s68 = smul.addr %s67, 8
    %s69 = scalar_lea.vmem %s4, %s68
    %s70 = sadd.s32 0, 0
    %p71 = scmp.eq.s32.totalorder 0, 0
    // Predicated region
    $region26: #{tpu_custom_call.1} parent=1 // pred_check
      %p72 = pneg %p71
    $region27: #{tpu_custom_call.1} parent=1 // pred_check_branch
      %74 = sbr.rel (%p72) target = $region29
    $region28: #{tpu_custom_call.1} parent=1 // pred_region
      %vm75 = vcmask 0
      %76 = vst.msk [vmem:[#allocation2] sm:$0x1] %vm75, 0.0
      %77 = vst.msk [vmem:[#allocation3] sm:$0x1] %vm75, 0.0
    $region29: #{tpu_custom_call.1} parent=1 // pred_fallthru
      _
    %v78 = vld [vmem:[%s62] sm:$0xff]
    %v79 = vld [vmem:[#allocation4] sm:$0xff]
    %v80 = vld [vmem:[%s2] sm:$0xff]
    %v81 = vld [vmem:[%s3] sm:$0x1]
    %v82 = vld [vmem:[%s69] sm:$0xff]
    %v83 = vlaneseq
    %v84 = vand.u32 %v83, 127
    %85 = vset.pattern.permute.xlu0 0
    %86 = vperm.xlu0 %85, %v82
    %v87 = vpop.permute.xlu0 %86
    %vm88 = vcmp.eq.s32.totalorder %v84, %v87
    %v89 = vsel %vm88, 1, 0
    %v90 = vcvt.s32.f32 %v89
    %vm91 = vcmask 64512
    %v92 = vsel %vm91, %v78, -inf
    %93 = vmax.xlane.f32.xlu0 %v92
    %v94 = vpop.xlane.xlu0 %93
    %v95 = vsub.f32 %v78, %v94
    %v96 = vmul.f32 %v95, 1.442695
    %v97 = vpow.pop %v96
    %v98 = vsel %vm91, %v97, 0.0
    %99 = vadd.xlane.f32.xlu0 %v98
    %v100 = vpop.xlane.xlu0 %99
    %v101 = vlog2.pop %v100
    %v102 = vmul.f32 %v101, 0.6931472
    %v103 = vadd.f32 %v94, %v102
    %v104 = vmul.f32 %v90, %v78
    %v105 = vsel %vm91, %v104, 0.0
    %106 = vadd.xlane.f32.xlu0 %v105
    %v107 = vpop.xlane.xlu0 %106
    %v108 = vsub.f32 %v103, %v107
    %v109 = vmul.f32 %v79, %v79
    %vm110 = vcmask 261120
    %v111 = vsel %vm110, %v109, 0.0
    %112 = vadd.xlane.f32.xlu0 %v111
    %v113 = vpop.xlane.xlu0 %112
    %v115 = vsel %vm110, %v79, 0
    %v118 = vsel %vm110, %v80, 0
    %120 = vmatprep.subr.mxu0 0.0
    %121 = vmatpush1.xpose.msra.mxu0 %v118
    %122 = vmatprep.subr.mxu0 0.0
    %123 = vmatpush1.xpose.msra.mxu0 0.0
    %124 = vmatprep.subr.mxu0 0.0
    %125 = vmatpush1.xpose.msra.mxu0 0.0
    %126 = vmatprep.subr.mxu0 0.0
    %127 = vmatpush1.xpose.msra.mxu0 0.0
    %128 = vmatprep.subr.mxu0 0.0
    %129 = vmatpush1.xpose.msra.mxu0 0.0
    %130 = vmatprep.subr.mxu0 0.0
    %131 = vmatpush1.xpose.msra.mxu0 0.0
    %132 = vmatprep.subr.mxu0 0.0
    %133 = vmatpush1.xpose.msra.mxu0 0.0
    %134 = vmatprep.subr.mxu0 0.0
    %135 = vmatpush1.xpose.msra.mxu0 0.0
    %136 = vmatprep.subr.mxu0 0.0
    %137 = vmatpush1.xpose.msra.mxu0 0.0
    %138 = vmatprep.subr.mxu0 0.0
    %139 = vmatpush1.xpose.msra.mxu0 0.0
    %140 = vmatprep.subr.mxu0 0.0
    %141 = vmatpush1.xpose.msra.mxu0 0.0
    %142 = vmatprep.subr.mxu0 0.0
    %143 = vmatpush1.xpose.msra.mxu0 0.0
    %144 = vmatprep.subr.mxu0 0.0
    %145 = vmatpush1.xpose.msra.mxu0 0.0
    %146 = vmatprep.subr.mxu0 0.0
    %147 = vmatpush1.xpose.msra.mxu0 0.0
    %148 = vmatprep.subr.mxu0 0.0
    %149 = vmatpush1.xpose.msra.mxu0 0.0
    %150 = vmatprep.subr.mxu0 0.0
    %151 = vmatpush1.xpose.msra.mxu0 0.0
    %152 = vmatprep.subr.mxu0 0.0
    %153 = vmatpush1.xpose.msra.mxu0 0.0
    %154 = vmatprep.subr.mxu0 0.0
    %155 = vmatpush1.xpose.msra.mxu0 0.0
    %156 = vmatprep.subr.mxu0 0.0
    %157 = vmatpush1.xpose.msra.mxu0 0.0
    %158 = vmatprep.subr.mxu0 0.0
    %159 = vmatpush1.xpose.msra.mxu0 0.0
    %160 = vmatprep.subr.mxu0 0.0
    %161 = vmatpush1.xpose.msra.mxu0 0.0
    %162 = vmatprep.subr.mxu0 0.0
    %163 = vmatpush1.xpose.msra.mxu0 0.0
    %164 = vmatprep.subr.mxu0 0.0
    %165 = vmatpush1.xpose.msra.mxu0 0.0
    %166 = vmatprep.subr.mxu0 0.0
    %167 = vmatpush1.xpose.msra.mxu0 0.0
    %168 = vmatprep.subr.mxu0 0.0
    %169 = vmatpush1.xpose.msra.mxu0 0.0
    %170 = vmatprep.subr.mxu0 0.0
    %171 = vmatpush1.xpose.msra.mxu0 0.0
    %172 = vmatprep.subr.mxu0 0.0
    %173 = vmatpush1.xpose.msra.mxu0 0.0
    %174 = vmatprep.subr.mxu0 0.0
    %175 = vmatpush1.xpose.msra.mxu0 0.0
    %176 = vmatprep.subr.mxu0 0.0
    %177 = vmatpush1.xpose.msra.mxu0 0.0
    %178 = vmatprep.subr.mxu0 0.0
    %179 = vmatpush1.xpose.msra.mxu0 0.0
    %180 = vmatprep.subr.mxu0 0.0
    %181 = vmatpush1.xpose.msra.mxu0 0.0
    %182 = vmatprep.subr.mxu0 0.0
    %183 = vmatpush1.xpose.msra.mxu0 0.0
    %184 = vmatprep.mubr.f32.mxu0 0.0
    %185 = vmatmul.mubr.f32.gmra.mrb[0].mxu0 %v115
    %v186 = vpop.f32.mrb[0].mxu0
    %v187 = vadd.f32 0.0, %v186
    %v188 = vpop.f32.mrb[0].mxu0
    %189 = vdwg.mxu0
    %v190 = vmul.f32 %v90, %v187
    %v191 = vsel %vm91, %v190, 0.0
    %192 = vadd.xlane.f32.xlu0 %v191
    %v193 = vpop.xlane.xlu0 %192
    %v195 = vlaneseq
    %v196 = vshrl.u32 %v195, 7
    %v197 = vsub.s32 0, %v196
    %v198 = vrot.slane %v81, %v197
    %v200 = vmul.f32 %v90, %v198
    %v201 = vsel %vm91, %v200, 0.0
    %202 = vadd.xlane.f32.xlu0 %v201
    %v203 = vpop.xlane.xlu0 %202
    %v204 = vmul.f32 %v193, 2.0
    %v205 = vsub.f32 %v113, %v204
    %v206 = vadd.f32 %v205, %v203
    %v207 = vmax.f32 %v206, 0.0
    %v208 = vrsqrt.pop %v207
    %v209 = vmul.f32 %v207, %v208
    %vm210 = vcmp.eq.f32.partialorder %v207, inf
    %v211 = vsel %vm210, %v207, %v209
    %vm212 = vcmp.eq.f32.partialorder %v207, 0.0
    %v213 = vand.u32 %v207, 2147483648
    %v214 = vsel %vm212, %v213, %v211
    %v215 = vsub.f32 5.0, %v214
    %v216 = vmax.f32 %v215, 0.0
    %v217 = vld [vmem:[#allocation2] sm:$0x1]
    %v218 = vrot.slane %v108, 4
    %v219 = vadd.f32 %v108, %v218
    %v220 = vrot.slane %v219, 2
    %v221 = vadd.f32 %v219, %v220
    %v222 = vrot.slane %v221, 1
    %v223 = vadd.f32 %v221, %v222
    %v224 = vadd.f32 %v217, %v223
    %vm225 = vcmask 0
    %226 = vst.msk [vmem:[#allocation2] sm:$0x1] %vm225, %v224
    %v227 = vld [vmem:[#allocation3] sm:$0x1]
    %v228 = vrot.slane %v216, 4
    %v229 = vadd.f32 %v216, %v228
    %v230 = vrot.slane %v229, 2
    %v231 = vadd.f32 %v229, %v230
    %v232 = vrot.slane %v231, 1
    %v233 = vadd.f32 %v231, %v232
    %v234 = vadd.f32 %v227, %v233
    %235 = vst.msk [vmem:[#allocation3] sm:$0x1] %vm225, %v234
    // Predicated region
    $region30: #{tpu_custom_call.1} parent=1 // pred_check
      %p236 = pneg %p71
    $region31: #{tpu_custom_call.1} parent=1 // pred_check_branch
      %238 = sbr.rel (%p236) target = $region33
    $region32: #{tpu_custom_call.1} parent=1 // pred_region
      %v239 = vld [vmem:[#allocation2] sm:$0x1]
      %v241 = vlaneseq
      %v242 = vshrl.u32 %v241, 7
      %v243 = vsub.s32 0, %v242
      %v244 = vrot.slane %v239, %v243
      %245 = vset.pattern.permute.xlu0 0
      %246 = vperm.xlu0 %245, %v244
      %v247 = vpop.permute.xlu0 %246
      %v249 = vld [vmem:[#allocation3] sm:$0x1]
      %v251 = vlaneseq
      %v252 = vshrl.u32 %v251, 7
      %v253 = vsub.s32 0, %v252
      %v254 = vrot.slane %v249, %v253
      %255 = vset.pattern.permute.xlu0 0
      %256 = vperm.xlu0 %255, %v254
      %v257 = vpop.permute.xlu0 %256
      %vm259 = vcmp.eq.s32.totalorder %v84, 0
      %vm260 = vcmp.eq.s32.totalorder %v84, 1
      %v261 = vsel %vm260, %v257, 0.0
      %v262 = vsel %vm259, %v247, %v261
      %263 = vst [vmem:[#allocation7] sm:$0xff] %v262
    $region33: #{tpu_custom_call.1} parent=1 // pred_fallthru
      _
    // Predicated region
    $region34: #{tpu_custom_call.1} parent=1 // pred_check
      _
    $region35: #{tpu_custom_call.1} parent=1 // pred_check_branch
      %265 = sbr.rel (0) target = $region37
    $region36: #{tpu_custom_call.1} parent=1 // pred_region
      %s267 = ssub.s32 128, 128
      %268 = vsyncadd [#allocation6], %s267
      %s270 = sshll.u32 [#allocation7], 4
      %s271 = int_to_ptr.vmem [resolvable:$true] %s270
      %273 = dma.vmem_to_hbm [thread:$0]  %s271, 128, %s5, [#allocation6]
    $region37: #{tpu_custom_call.1} parent=1 // pred_fallthru
      _
    // Predicated region
    $region38: #{tpu_custom_call.1} parent=1 // pred_check
      _
    $region39: #{tpu_custom_call.1} parent=1 // pred_check_branch
      %275 = sbr.rel (0) target = $region41
    $region40: #{tpu_custom_call.1} parent=1 // pred_region
      %276 = dma.done [#allocation6], 128
    $region41: #{tpu_custom_call.1} parent=1 // pred_fallthru
      _
    %277 = vsyncpa [#allocation5], 1
    %278 = vsyncpa [#allocation6], 1

</llo_original>
